<compile_context>
chip_gen: v7x
topology: tpu7x:2x2x1
jax: 0.10.0
libtpu: 0.0.40
codegen_flags: <defaults>
</compile_context>

<pallas_src>
import functools

import jax
import jax.numpy as jnp
from jax.experimental import pallas as pl
from jax.experimental.pallas import tpu as pltpu


def _round_up(v: int, m: int) -> int:
    return (v + m - 1) // m * m


def _sublane_multiple(dtype) -> int:
    # Min second-to-last tile dim for a packed dtype: 8 (4B), 16 (2B), 32 (1B).
    return {4: 8, 2: 16, 1: 32}.get(jnp.dtype(dtype).itemsize, 8)


# --------------------------------------------------------------------------
# Kernels
# --------------------------------------------------------------------------
def _linear_kernel_f32out(x_ref, wt_ref, b_ref, o_ref):
    """f32 output: accumulate directly into the K-resident output block."""
    k = pl.program_id(2)

    @pl.when(k == 0)
    def _():
        o_ref[...] = jnp.broadcast_to(b_ref[...].astype(jnp.float32), o_ref.shape)

    o_ref[...] += jnp.dot(x_ref[...], wt_ref[...],
                          preferred_element_type=jnp.float32)


def _linear_kernel_acc(x_ref, wt_ref, b_ref, o_ref, acc_ref):
    """Non-f32 output: accumulate in an f32 VMEM scratch, cast on the last step."""
    k = pl.program_id(2)

    @pl.when(k == 0)
    def _():
        acc_ref[...] = jnp.broadcast_to(b_ref[...].astype(jnp.float32),
                                        acc_ref.shape)

    acc_ref[...] += jnp.dot(x_ref[...], wt_ref[...],
                            preferred_element_type=jnp.float32)

    @pl.when(k == pl.num_programs(2) - 1)
    def _():
        o_ref[...] = acc_ref[...].astype(o_ref.dtype)


# --------------------------------------------------------------------------
# Wrapper (per-call)
# --------------------------------------------------------------------------
@functools.partial(jax.jit,
                   static_argnames=("n_out", "tm", "tn", "tk", "small_fallback"))
def pallas_linear(x, weight_t, bias, *, n_out,
                  tm=512, tn=1024, tk=1024, small_fallback=False):
    """x @ weight.T + bias, with weight_t/bias pre-transposed & pre-padded at
    bind time (see prepare_linear_params)."""
    B, K = x.shape
    Kp, Np = weight_t.shape
    assert bias.shape == (1, Np), bias.shape
    assert K <= Kp and n_out <= Np, (K, Kp, n_out, Np)

    out_dtype = x.dtype

    # Degenerate problems are pure launch/pipeline overhead for a kernel;
    # let XLA's fused matmul handle them if the caller allows it.
    if small_fallback and (B * Kp * Np) <= (256 * 256 * 256):
        y = jnp.dot(x, weight_t[:K, :], preferred_element_type=jnp.float32)
        y = (y + bias[0].astype(jnp.float32)).astype(out_dtype)
        return y[:, :n_out]

    # --- activation padding: K must be zero-padded (accumulation correctness);
    #     batch only to the dtype's sublane multiple (NOT to a tm multiple). ---
    sub = _sublane_multiple(x.dtype)
    Bp = _round_up(B, sub)
    if (Bp, Kp) != (B, K):
        x = jnp.pad(x, ((0, Bp - B), (0, Kp - K)))

    # --- tile selection ---
    tm = min(tm, Bp)
    tn = min(tn, Np)
    tk = min(tk, Kp)
    # tk must divide Kp exactly so no partial (garbage) K block is accumulated.
    while Kp % tk:
        tk -= 128

    # v7x has 2 TensorCores: make sure there are >= 2 "parallel" output blocks.
    if pl.cdiv(Bp, tm) * pl.cdiv(Np, tn) < 2 and Np >= 256:
        tn = _round_up(pl.cdiv(Np, 2), 128)

    # --- VMEM budget: double-buffered ins/outs (+ f32 scratch for non-f32 out),
    #     capped so it is safe even on v7x's 64 MiB per-TC VMEM. ---
    bytes_x = jnp.dtype(x.dtype).itemsize
    bytes_w = jnp.dtype(weight_t.dtype).itemsize
    bytes_o = jnp.dtype(out_dtype).itemsize
    bytes_b = jnp.dtype(bias.dtype).itemsize

    def footprint(tm_, tn_, tk_):
        f = 2 * (tm_ * tk_ * bytes_x + tk_ * tn_ * bytes_w
                 + tm_ * tn_ * bytes_o + tn_ * bytes_b)
        if out_dtype != jnp.float32:
            f += tm_ * tn_ * 4  # accumulator scratch
        return f

    budget = 40 * 1024 * 1024
    while footprint(tm, tn, tk) > budget and tn > 128:
        tn = max(128, _round_up(tn // 2, 128))
    while footprint(tm, tn, tk) > budget and tm > sub:
        tm = max(sub, _round_up(tm // 2, sub))
    while footprint(tm, tn, tk) > budget and tk > 128:
        tk = max(128, _round_up(tk // 2, 128))
        while Kp % tk:
            tk -= 128

    fp = footprint(tm, tn, tk)
    # Raise the scoped-VMEM limit (v5e default is 16 MiB) but stay well under
    # v7x's 64 MiB physical VMEM.
    vmem_limit = int(min(max(fp + fp // 4 + (2 << 20), 32 << 20), 56 << 20))

    grid = (pl.cdiv(Bp, tm), pl.cdiv(Np, tn), Kp // tk)

    if out_dtype == jnp.float32:
        kernel = _linear_kernel_f32out
        scratch = []
    else:
        kernel = _linear_kernel_acc
        scratch = [pltpu.VMEM((tm, tn), jnp.float32)]

    out_p = pl.pallas_call(
        kernel,
        out_shape=jax.ShapeDtypeStruct((Bp, Np), out_dtype),
        grid_spec=pltpu.PrefetchScalarGridSpec(
            num_scalar_prefetch=0,
            grid=grid,
            in_specs=[
                pl.BlockSpec((tm, tk), lambda i, j, k: (i, k)),   # x
                pl.BlockSpec((tk, tn), lambda i, j, k: (k, j)),   # weight_t
                pl.BlockSpec((1, tn), lambda i, j, k: (0, j)),    # bias
            ],
            out_specs=pl.BlockSpec((tm, tn), lambda i, j, k: (i, j)),
            scratch_shapes=scratch,
        ),
        compiler_params=pltpu.CompilerParams(
            dimension_semantics=("parallel", "parallel", "arbitrary"),
            vmem_limit_bytes=vmem_limit,
        ),
    )(x, weight_t, bias)

    if (Bp, Np) != (B, n_out):
        out_p = out_p[:B, :n_out]
    return out_p


# --------------------------------------------------------------------------
# Bind-time (one-shot) parameter preparation
# --------------------------------------------------------------------------
def prepare_linear_params(weight, bias, *, param_dtype=None):
    """Transpose weight to lane-dense (K, N), zero-pad K/N to multiples of 128
    and reshape bias to (1, Np) ONCE, at PartialModule construction time.
    Optionally cast the weight (dominant HBM traffic) to e.g. bfloat16."""
    N, K = weight.shape
    wt = weight.T                                   # (K, N)
    Kp, Np = _round_up(K, 128), _round_up(N, 128)
    if (Kp, Np) != (K, N):
        wt = jnp.pad(wt, ((0, Kp - K), (0, Np - N)))
    b = bias
    if Np != N:
        b = jnp.pad(b, (0, Np - N))
    b = b.reshape(1, Np)
    if param_dtype is not None:
        wt = wt.astype(param_dtype)
    return jax.block_until_ready(wt), jax.block_until_ready(b), N


class PartialModule:
    """JAX re-implementation of the PyTorch PartialModule wrapper.

    forward(*args, **kwargs) = func(*self.args, *args, **{**self.kwargs, **kwargs})
    """

    def __init__(self, func, *args, **kwargs):
        self.func = func
        self.args = args
        self.kwargs = kwargs

    def __call__(self, *args, **kwargs):
        return self.func(*self.args, *args, **{**self.kwargs, **kwargs})


if __name__ == "__main__":
    key = jax.random.PRNGKey(0)
    k_x, k_w, k_b = jax.random.split(key, 3)

    batch, in_features, out_features = 8, 32, 128

    x = jax.random.normal(k_x, (batch, in_features), dtype=jnp.float32)
    # Synthetic parameters with LazyLinear-materialized shapes:
    #   weight: (out_features, in_features), bias: (out_features,)
    weight = jax.random.normal(k_w, (out_features, in_features),
                               dtype=jnp.float32) * 0.02
    bias = jax.random.normal(k_b, (out_features,), dtype=jnp.float32) * 0.01

    # Bind-time (one-shot) transpose + pad — bound constants of PartialModule,
    # NOT recomputed per forward call.
    weight_t, bias2, n_out = prepare_linear_params(weight, bias)

    # PartialModule(func=pallas_linear, bound kwargs); forward(x) supplies the
    # remaining positional arg of `func` — same semantics as the PyTorch module.
    # small_fallback=False so the Pallas kernel itself is exercised here.
    module = PartialModule(pallas_linear, weight_t=weight_t, bias=bias2,
                           n_out=n_out, small_fallback=False)

    y = jax.block_until_ready(module(x))

    # Correctness check against a plain-JAX reference of the same bound func.
    y_ref = x @ weight.T + bias
    assert y.shape == (batch, out_features), y.shape
    assert jnp.allclose(y, y_ref, atol=1e-4, rtol=1e-4)

    print("KERNEL_OK")
</pallas_src>

<mosaic_0001>
module attributes {stable_mosaic.version = 11 : i64} {
  func.func @_linear_kernel_f32out(%arg0: i32, %arg1: i32, %arg2: i32, %arg3: memref<8x128xf32, #tpu.memory_space<vmem>>, %arg4: memref<128x128xf32, #tpu.memory_space<vmem>>, %arg5: memref<1x128xf32, #tpu.memory_space<vmem>>, %arg6: memref<8x128xf32, #tpu.memory_space<vmem>>) attributes {dimension_semantics = [#tpu.dimension_semantics<parallel>, #tpu.dimension_semantics<parallel>, #tpu.dimension_semantics<arbitrary>], iteration_bounds = array<i64: 1, 1, 1>, scalar_prefetch = 0 : i64, scratch_operands = 0 : i64, tpu.core_type = #tpu.core_type<tc>, window_params = [{transform_indices = @transform_0, window_bounds = array<i64: 8, 128>}, {transform_indices = @transform_1, window_bounds = array<i64: 128, 128>}, {transform_indices = @transform_2, window_bounds = array<i64: 1, 128>}, {transform_indices = @transform_3, window_bounds = array<i64: 8, 128>}]} {
    %c0_i32 = arith.constant 0 : i32
    %0 = arith.cmpi eq, %arg2, %c0_i32 : i32
    %1 = arith.extui %0 : i1 to i32
    %c0_i32_0 = arith.constant 0 : i32
    %2 = arith.cmpi ne, %1, %c0_i32_0 : i32
    scf.if %2 {
      %c0_8 = arith.constant 0 : index
      %c0_9 = arith.constant 0 : index
      %9 = vector.load %arg5[%c0_8, %c0_9] : memref<1x128xf32, #tpu.memory_space<vmem>>, vector<1x128xf32>
      %10 = vector.shape_cast %9 : vector<1x128xf32> to vector<1x128xf32>
      %11 = vector.broadcast %10 : vector<1x128xf32> to vector<8x128xf32>
      %c0_10 = arith.constant 0 : index
      %c0_11 = arith.constant 0 : index
      %12 = vector.load %arg6[%c0_10, %c0_11] : memref<8x128xf32, #tpu.memory_space<vmem>>, vector<8x128xf32>
      tpu.vector_store %arg6[%c0_10, %c0_11], %11 {strides = array<i32>} : memref<8x128xf32, #tpu.memory_space<vmem>>, vector<8x128xf32>,
    } else {
    }
    %c0 = arith.constant 0 : index
    %c0_1 = arith.constant 0 : index
    %3 = vector.load %arg6[%c0, %c0_1] : memref<8x128xf32, #tpu.memory_space<vmem>>, vector<8x128xf32>
    %c0_2 = arith.constant 0 : index
    %c0_3 = arith.constant 0 : index
    %4 = vector.load %arg3[%c0_2, %c0_3] : memref<8x128xf32, #tpu.memory_space<vmem>>, vector<8x128xf32>
    %c0_4 = arith.constant 0 : index
    %c0_5 = arith.constant 0 : index
    %5 = vector.load %arg4[%c0_4, %c0_5] : memref<128x128xf32, #tpu.memory_space<vmem>>, vector<128x128xf32>
    %cst = arith.constant dense<0.000000e+00> : vector<8x128xf32>
    %6 = tpu.matmul %4, %5, %cst {dimension_numbers = #tpu.dot_dimension_numbers<[1], [0], [0], [1], [0, 0, 1, 1], [], []>} : vector<8x128xf32>, vector<128x128xf32>, vector<8x128xf32> -> vector<8x128xf32>
    %7 = arith.addf %3, %6 : vector<8x128xf32>
    %c0_6 = arith.constant 0 : index
    %c0_7 = arith.constant 0 : index
    %8 = vector.load %arg6[%c0_6, %c0_7] : memref<8x128xf32, #tpu.memory_space<vmem>>, vector<8x128xf32>
    tpu.vector_store %arg6[%c0_6, %c0_7], %7 {strides = array<i32>} : memref<8x128xf32, #tpu.memory_space<vmem>>, vector<8x128xf32>,
    return
  }
  func.func @transform_0(%arg0: i32, %arg1: i32, %arg2: i32) -> (i32, i32) {
    %c0_i32 = arith.constant 0 : i32
    return %arg0, %arg2 : i32, i32
  }
  func.func @transform_1(%arg0: i32, %arg1: i32, %arg2: i32) -> (i32, i32) {
    %c0_i32 = arith.constant 0 : i32
    return %arg2, %arg1 : i32, i32
  }
  func.func @transform_2(%arg0: i32, %arg1: i32, %arg2: i32) -> (i32, i32) {
    %c0_i32 = arith.constant 0 : i32
    %c0_i32_0 = arith.constant 0 : i32
    return %c0_i32, %arg1 : i32, i32
  }
  func.func @transform_3(%arg0: i32, %arg1: i32, %arg2: i32) -> (i32, i32) {
    %c0_i32 = arith.constant 0 : i32
    return %arg0, %arg1 : i32, i32
  }
}

</mosaic_0001>

<llo_original>
// kernel: pallas_linear.1
$region0: #{pallas_linear.1}
  #allocation0 [shape = 'u32[]', space=smem, size = 0x4, offset = 0x4, fixed_abs, tag = 'smem constant byte address 0x4 - core index']
  #allocation1 [shape = 'u32[144,128]{1,0:T(1,128)}', space=vmem, size = 0x12000, scoped, tag = 'internal scratch']
  %s0 = inlined_call_operand.vmem [shape: f32[8,128], index: 0, kind: input, shape index: {}]
  %s1 = inlined_call_operand.hbm [shape: f32[128,128], index: 1, kind: input, shape index: {}]
  %s2 = inlined_call_operand.vmem [shape: f32[1,128], index: 2, kind: input, shape index: {}]
  %s3 = inlined_call_operand.hbm [shape: f32[8,128], index: 3, kind: output, shape index: {}]
  %s4 = sld [smem:[#allocation0]]
  $region30: #{pallas_linear.1} parent=0
    _
  %s6 = ssub.s32 1, %s4
  %s7 = scalar_select 0, %s6, %s4
  $region1: #{pallas_linear.1} parent=0
    #allocation2 [shape = 'u8[65536]{0}', space=vmem, size = 0x10000, scoped, tag = 'input window, operand 1, single buffered']
    #allocation3 [shape = 's32[1]{0}', space=sflag, size = 0x4, scoped, tag = 'scoped memory for pallas_linear.1']
    #allocation4 [shape = 's32[1]{0}', space=sflag, size = 0x4, scoped, tag = 'scoped memory for pallas_linear.1']
    #allocation5 [shape = 'u8[4096]{0}', space=vmem, size = 0x1000, scoped, tag = 'output window, operand 0, single buffered']
    %8 = vsyncpa [#allocation3], 0
    %9 = vsyncpa [#allocation4], 0
    // Predicated region
    $region2: #{pallas_linear.1} parent=1 // pred_check
      _
    $region3: #{pallas_linear.1} parent=1 // pred_check_branch
      %11 = sbr.rel (0) target = $region5
    $region4: #{pallas_linear.1} parent=1 // pred_region
      _
    $region5: #{pallas_linear.1} parent=1 // pred_fallthru
      _
    // Predicated region
    $region6: #{pallas_linear.1} parent=1 // pred_check
      _
    $region7: #{pallas_linear.1} parent=1 // pred_check_branch
      %13 = sbr.rel (0) target = $region9
    $region8: #{pallas_linear.1} parent=1 // pred_region
      %s15 = ssub.s32 2048, 2048
      %16 = vsyncadd [#allocation3], %s15
      %s17 = sshll.u32 [#allocation2], 4
      %s18 = int_to_ptr.vmem [resolvable:$true] %s17
      %23 = dma.hbm_to_vmem [thread:$0]  %s1, 2048, %s18, [#allocation3], 128, 128, 8
    $region9: #{pallas_linear.1} parent=1 // pred_fallthru
      _
    // Predicated region
    $region10: #{pallas_linear.1} parent=1 // pred_check
      _
    $region11: #{pallas_linear.1} parent=1 // pred_check_branch
      %25 = sbr.rel (0) target = $region13
    $region12: #{pallas_linear.1} parent=1 // pred_region
      _
    $region13: #{pallas_linear.1} parent=1 // pred_fallthru
      _
    // Predicated region
    $region14: #{pallas_linear.1} parent=1 // pred_check
      _
    $region15: #{pallas_linear.1} parent=1 // pred_check_branch
      %27 = sbr.rel (0) target = $region17
    $region16: #{pallas_linear.1} parent=1 // pred_region
      %28 = dma.done [#allocation3], 2048
    $region17: #{pallas_linear.1} parent=1 // pred_fallthru
      _
    %p29 = scmp.eq.s32.totalorder 0, 0
    // Predicated region
    $region18: #{pallas_linear.1} parent=1 // pred_check
      %p30 = pneg %p29
    $region19: #{pallas_linear.1} parent=1 // pred_check_branch
      %32 = sbr.rel (%p30) target = $region21
    $region20: #{pallas_linear.1} parent=1 // pred_region
      %v33 = vld [vmem:[%s2] sm:$0x1]
      %v35 = vlaneseq
      %v36 = vshrl.u32 %v35, 7
      %v37 = vsub.s32 0, %v36
      %v38 = vrot.slane %v33, %v37
      %40 = vst [vmem:[#allocation5] sm:$0xff] %v38
    $region21: #{pallas_linear.1} parent=1 // pred_fallthru
      _
    %v41 = vld [vmem:[#allocation5] sm:$0xff]
    %v42 = vld [vmem:[%s0] sm:$0xff]
    %v43 = vld [vmem:[#allocation2] sm:$0xff]
    %v44 = vld [vmem:[#allocation2 + $0x8] sm:$0xff]
    %v45 = vld [vmem:[#allocation2 + $0x10] sm:$0xff]
    %v46 = vld [vmem:[#allocation2 + $0x18] sm:$0xff]
    %v47 = vld [vmem:[#allocation2 + $0x20] sm:$0xff]
    %v48 = vld [vmem:[#allocation2 + $0x28] sm:$0xff]
    %v49 = vld [vmem:[#allocation2 + $0x30] sm:$0xff]
    %v50 = vld [vmem:[#allocation2 + $0x38] sm:$0xff]
    %v51 = vld [vmem:[#allocation2 + $0x40] sm:$0xff]
    %v52 = vld [vmem:[#allocation2 + $0x48] sm:$0xff]
    %v53 = vld [vmem:[#allocation2 + $0x50] sm:$0xff]
    %v54 = vld [vmem:[#allocation2 + $0x58] sm:$0xff]
    %v55 = vld [vmem:[#allocation2 + $0x60] sm:$0xff]
    %v56 = vld [vmem:[#allocation2 + $0x68] sm:$0xff]
    %v57 = vld [vmem:[#allocation2 + $0x70] sm:$0xff]
    %v58 = vld [vmem:[#allocation2 + $0x78] sm:$0xff]
    %59 = vmatprep.subr.mxu0 0.0
    %60 = vmatpush1.msra.mxu0 %v43
    %61 = vmatprep.subr.mxu0 0.0
    %62 = vmatpush1.msra.mxu0 %v44
    %63 = vmatprep.subr.mxu0 0.0
    %64 = vmatpush1.msra.mxu0 %v45
    %65 = vmatprep.subr.mxu0 0.0
    %66 = vmatpush1.msra.mxu0 %v46
    %67 = vmatprep.subr.mxu0 0.0
    %68 = vmatpush1.msra.mxu0 %v47
    %69 = vmatprep.subr.mxu0 0.0
    %70 = vmatpush1.msra.mxu0 %v48
    %71 = vmatprep.subr.mxu0 0.0
    %72 = vmatpush1.msra.mxu0 %v49
    %73 = vmatprep.subr.mxu0 0.0
    %74 = vmatpush1.msra.mxu0 %v50
    %75 = vmatprep.subr.mxu0 0.0
    %76 = vmatpush1.msra.mxu0 %v51
    %77 = vmatprep.subr.mxu0 0.0
    %78 = vmatpush1.msra.mxu0 %v52
    %79 = vmatprep.subr.mxu0 0.0
    %80 = vmatpush1.msra.mxu0 %v53
    %81 = vmatprep.subr.mxu0 0.0
    %82 = vmatpush1.msra.mxu0 %v54
    %83 = vmatprep.subr.mxu0 0.0
    %84 = vmatpush1.msra.mxu0 %v55
    %85 = vmatprep.subr.mxu0 0.0
    %86 = vmatpush1.msra.mxu0 %v56
    %87 = vmatprep.subr.mxu0 0.0
    %88 = vmatpush1.msra.mxu0 %v57
    %89 = vmatprep.subr.mxu0 0.0
    %90 = vmatpush1.msra.mxu0 %v58
    %91 = vmatprep.subr.mxu0 0.0
    %92 = vmatpush1.msra.mxu0 0.0
    %93 = vmatprep.subr.mxu0 0.0
    %94 = vmatpush1.msra.mxu0 0.0
    %95 = vmatprep.subr.mxu0 0.0
    %96 = vmatpush1.msra.mxu0 0.0
    %97 = vmatprep.subr.mxu0 0.0
    %98 = vmatpush1.msra.mxu0 0.0
    %99 = vmatprep.subr.mxu0 0.0
    %100 = vmatpush1.msra.mxu0 0.0
    %101 = vmatprep.subr.mxu0 0.0
    %102 = vmatpush1.msra.mxu0 0.0
    %103 = vmatprep.subr.mxu0 0.0
    %104 = vmatpush1.msra.mxu0 0.0
    %105 = vmatprep.subr.mxu0 0.0
    %106 = vmatpush1.msra.mxu0 0.0
    %107 = vmatprep.subr.mxu0 0.0
    %108 = vmatpush1.msra.mxu0 0.0
    %109 = vmatprep.subr.mxu0 0.0
    %110 = vmatpush1.msra.mxu0 0.0
    %111 = vmatprep.subr.mxu0 0.0
    %112 = vmatpush1.msra.mxu0 0.0
    %113 = vmatprep.subr.mxu0 0.0
    %114 = vmatpush1.msra.mxu0 0.0
    %115 = vmatprep.subr.mxu0 0.0
    %116 = vmatpush1.msra.mxu0 0.0
    %117 = vmatprep.subr.mxu0 0.0
    %118 = vmatpush1.msra.mxu0 0.0
    %119 = vmatprep.subr.mxu0 0.0
    %120 = vmatpush1.msra.mxu0 0.0
    %121 = vmatprep.subr.mxu0 0.0
    %122 = vmatpush1.msra.mxu0 0.0
    %123 = vmatprep.mubr.f32.mxu0 0.0
    %124 = vmatmul.mubr.f32.gmra.mrb[0].mxu0 %v42
    %v125 = vpop.f32.mrb[0].mxu0
    %v126 = vadd.f32 0.0, %v125
    %v127 = vpop.f32.mrb[0].mxu0
    %128 = vdwg.mxu0
    %v129 = vadd.f32 %v41, %v126
    %130 = vst [vmem:[#allocation5] sm:$0xff] %v129
    // Predicated region
    $region22: #{pallas_linear.1} parent=1 // pred_check
      _
    $region23: #{pallas_linear.1} parent=1 // pred_check_branch
      %132 = sbr.rel (0) target = $region25
    $region24: #{pallas_linear.1} parent=1 // pred_region
      %s134 = ssub.s32 128, 128
      %135 = vsyncadd [#allocation4], %s134
      %s137 = sshll.u32 [#allocation5], 4
      %s138 = int_to_ptr.vmem [resolvable:$true] %s137
      %140 = dma.vmem_to_hbm [thread:$0]  %s138, 128, %s3, [#allocation4]
    $region25: #{pallas_linear.1} parent=1 // pred_fallthru
      _
    // Predicated region
    $region26: #{pallas_linear.1} parent=1 // pred_check
      _
    $region27: #{pallas_linear.1} parent=1 // pred_check_branch
      %142 = sbr.rel (0) target = $region29
    $region28: #{pallas_linear.1} parent=1 // pred_region
      %143 = dma.done [#allocation4], 128
    $region29: #{pallas_linear.1} parent=1 // pred_fallthru
      _
    %144 = vsyncpa [#allocation3], 1
    %145 = vsyncpa [#allocation4], 1

</llo_original>
